<compile_context>
chip_gen: v7x
topology: tpu7x:2x2x1
jax: 0.10.0
libtpu: 0.0.40
codegen_flags: <defaults>
</compile_context>

<pallas_src>
import functools

import jax
import jax.numpy as jnp
from jax import lax
from jax.experimental import pallas as pl
from jax.experimental.pallas import tpu as pltpu

_EPS = 1e-3                 # DiceLoss default eps
_LANES = 128
_SUB = 8
_PAD_LOGIT = -1e30          # tanh saturates -> sigmoid(pad) == 0 exactly
_TARGET_STEP_BYTES = 12 * 1024 * 1024   # both input blocks per grid step
_VMEM_LIMIT = 32 * 1024 * 1024


def _round_up(x, m):
    return -(-x // m) * m


def _cdiv(a, b):
    return -(-a // b)


def _dice_partial_kernel(p_ref, t_ref, o_ref, *, n_rows, blocks_per_shard,
                         chunk, has_tail):
    """Accumulate per-batch partial sums of (p*t, p*p, t*t) for one row block.

    p_ref, t_ref: (B, tr, Wk) blocks (native dtypes).
    o_ref: (1, 3, B, 8, Wk) f32 accumulator, resident across the reduction
           (grid axis 1); one slab per shard (grid axis 0).
    """
    c = pl.program_id(0)
    k = pl.program_id(1)

    @pl.when(k == 0)
    def _():
        o_ref[...] = jnp.zeros_like(o_ref)

    bsz, tr, wk = p_ref.shape
    n_chunks = tr // chunk
    # first global row owned by this block
    row0 = (c * blocks_per_shard + k) * tr

    def run(masked):
        def body(i, carry):
            acc_a, acc_b, acc_c = carry
            off = pl.multiple_of(i * chunk, chunk)
            x = p_ref[:, pl.ds(off, chunk), :].astype(jnp.float32)
            t = t_ref[:, pl.ds(off, chunk), :].astype(jnp.float32)
            if masked:
                rows = row0 + off + lax.broadcasted_iota(
                    jnp.int32, (1, chunk, 1), 1)
                valid = rows < n_rows
                # jnp.where (not multiply) so garbage in the padded region of
                # the boundary block can never poison the sums.
                x = jnp.where(valid, x, _PAD_LOGIT)   # sigmoid -> exactly 0
                t = jnp.where(valid, t, 0.0)
            p = 0.5 * jnp.tanh(0.5 * x) + 0.5          # sigmoid: one EUP op
            p4 = p.reshape(bsz, chunk // _SUB, _SUB, wk)   # layout no-op
            t4 = t.reshape(bsz, chunk // _SUB, _SUB, wk)
            # reduce only across the vreg-index axis -> pure VPU adds;
            # accumulators stay (8, lane)-dense; cross-lane reduce deferred
            # to the wrapper epilogue.
            acc_a = acc_a + jnp.sum(p4 * t4, axis=1)
            acc_b = acc_b + jnp.sum(p4 * p4, axis=1)
            acc_c = acc_c + jnp.sum(t4 * t4, axis=1)
            return acc_a, acc_b, acc_c

        z = jnp.zeros((bsz, _SUB, wk), jnp.float32)
        acc_a, acc_b, acc_c = lax.fori_loop(0, n_chunks, body, (z, z, z))
        # touch the VMEM-resident output only once per quantity per step
        o_ref[0, 0] += acc_a
        o_ref[0, 1] += acc_b
        o_ref[0, 2] += acc_c

    if has_tail:
        is_tail = row0 + tr > n_rows      # only the global last block is partial

        @pl.when(is_tail)
        def _():
            run(True)

        @pl.when(jnp.logical_not(is_tail))
        def _():
            run(False)
    else:
        run(False)


def combined_loss(mask_pred, mask_gt, skeleton_pred=None, skeleton_gt=None):
    """Matches CombinedLoss(weight_dice=1.0).forward -> scalar dice loss.

    mask_pred, mask_gt: (B, H, W).  skeleton_* accepted but unused, exactly
    like the reference forward().  Inputs stream in their native dtype and
    are cast to f32 inside the kernel.
    """
    B, H, W = mask_pred.shape
    N = H * W

    p = mask_pred
    t = mask_gt
    if jnp.issubdtype(t.dtype, jnp.bool_):
        # i1 blocks are fragile to lower; a 1-byte stream is the cheapest safe form
        t = t.astype(jnp.uint8)

    # Lane-dense view WITHOUT materializing a padded copy (reshapes are free):
    if N % _LANES == 0:
        Hk, Wk = N // _LANES, _LANES          # fully dense lanes & sublanes
        p3 = p.reshape(B, Hk, Wk)
        t3 = t.reshape(B, Hk, Wk)
    else:
        Hk, Wk = H, W                         # natural view; lane padding is
        p3, t3 = p, t                         # VPU/VMEM-only, zero extra HBM
    Wk_pad = _round_up(Wk, _LANES)            # VMEM lane footprint

    # sublane tile of the narrowest input dtype (f32:8, bf16:16, u8:32)
    row_tile = max(_SUB, 32 // p3.dtype.itemsize, 32 // t3.dtype.itemsize)

    # rows per inner-loop chunk: ~64 KiB of f32 working set per input chunk
    chunk = max(row_tile,
                _round_up(max(1, 16384 // max(1, B * Wk_pad)), row_tile))
    chunk = min(chunk, max(row_tile, 256))

    # rows per grid step: largest multiple of `chunk` keeping both input
    # blocks (double buffered by the pipeline) inside the VMEM budget.
    step_row_bytes = B * Wk_pad * (p3.dtype.itemsize + t3.dtype.itemsize)
    tr_cap = max(chunk,
                 (_TARGET_STEP_BYTES // step_row_bytes) // chunk * chunk)

    # K-first, balanced tiling: derive the block count from the capped block
    # size, prefer an even count (megacore sharding on v7x), re-balance.
    nblocks = _cdiv(Hk, tr_cap)
    if nblocks % 2 != 0 and Hk > nblocks * chunk:
        nblocks += 1
    tr = max(chunk, _round_up(_cdiv(Hk, nblocks), chunk))
    nblocks = _cdiv(Hk, tr)                   # guarantees no fully-empty block
    nshards = 2 if nblocks % 2 == 0 else 1
    K = nblocks // nshards
    has_tail = nblocks * tr > Hk              # at most one partial block

    kernel = functools.partial(
        _dice_partial_kernel, n_rows=Hk, blocks_per_shard=K,
        chunk=chunk, has_tail=has_tail)

    parts = pl.pallas_call(
        kernel,
        out_shape=jax.ShapeDtypeStruct((nshards, 3, B, _SUB, Wk), jnp.float32),
        grid_spec=pltpu.PrefetchScalarGridSpec(
            num_scalar_prefetch=0,
            grid=(nshards, K),
            in_specs=[
                pl.BlockSpec((B, tr, Wk), lambda c, k: (0, c * K + k, 0)),
                pl.BlockSpec((B, tr, Wk), lambda c, k: (0, c * K + k, 0)),
            ],
            out_specs=pl.BlockSpec((1, 3, B, _SUB, Wk),
                                   lambda c, k: (c, 0, 0, 0, 0)),
        ),
        compiler_params=pltpu.CompilerParams(
            dimension_semantics=("parallel", "arbitrary"),
            vmem_limit_bytes=_VMEM_LIMIT,   # lift v5e's 16 MiB default; safe on v7x
        ),
    )(p3, t3)

    # Tiny epilogue: combine the lane/sublane-dense partials per batch.
    a = parts[:, 0].sum(axis=(0, 2, 3))                  # (B,)
    b = parts[:, 1].sum(axis=(0, 2, 3)) + _EPS
    c = parts[:, 2].sum(axis=(0, 2, 3)) + _EPS
    # loss_weight = 1.0 (DiceLoss default)
    return jnp.mean(1.0 - 2.0 * a / (b + c))


def _reference(mask_pred, mask_gt):
    p = jax.nn.sigmoid(mask_pred.astype(jnp.float32)).reshape(
        mask_pred.shape[0], -1)
    t = mask_gt.astype(jnp.float32).reshape(mask_gt.shape[0], -1)
    a = jnp.sum(p * t, axis=1)
    b = jnp.sum(p * p, axis=1) + _EPS
    c = jnp.sum(t * t, axis=1) + _EPS
    return jnp.mean(1.0 - 2.0 * a / (b + c))


if __name__ == "__main__":
    key = jax.random.PRNGKey(0)
    k1, k2, k3, k4 = jax.random.split(key, 4)

    # primary small test (N multiple of 128 -> lane-dense (B, R, 128) path)
    B, H, W = 2, 16, 16
    mask_pred = jax.random.normal(k1, (B, H, W), dtype=jnp.float32)
    mask_gt = (jax.random.uniform(k2, (B, H, W)) > 0.5).astype(jnp.float32)
    skeleton_pred = jax.random.normal(k3, (B, H, W), dtype=jnp.float32)
    skeleton_gt = (jax.random.uniform(k4, (B, H, W)) > 0.8).astype(jnp.float32)

    loss = combined_loss(mask_pred, mask_gt, skeleton_pred, skeleton_gt)
    jax.block_until_ready(loss)
    ref = _reference(mask_pred, mask_gt)
    assert jnp.allclose(loss, ref, atol=1e-5, rtol=1e-5), (loss, ref)

    # odd spatial shape: natural (B, H, W) fallback + in-kernel tail masking
    H2, W2 = 17, 19
    mp2 = jax.random.normal(k3, (B, H2, W2), dtype=jnp.float32)
    mg2 = (jax.random.uniform(k4, (B, H2, W2)) > 0.5).astype(jnp.float32)
    loss2 = combined_loss(mp2, mg2)
    jax.block_until_ready(loss2)
    ref2 = _reference(mp2, mg2)
    assert jnp.allclose(loss2, ref2, atol=1e-5, rtol=1e-5), (loss2, ref2)

    # bf16 logits path (no wrapper up-cast; halves the dominant HBM stream)
    mp3 = jax.random.normal(k1, (B, 24, 40), dtype=jnp.bfloat16)
    mg3 = (jax.random.uniform(k2, (B, 24, 40)) > 0.5).astype(jnp.float32)
    loss3 = combined_loss(mp3, mg3)
    jax.block_until_ready(loss3)
    ref3 = _reference(mp3.astype(jnp.float32), mg3)
    assert jnp.allclose(loss3, ref3, atol=1e-4, rtol=1e-4), (loss3, ref3)

    print("KERNEL_OK")
</pallas_src>

<mosaic_0001>
module attributes {stable_mosaic.version = 11 : i64} {
  func.func @_dice_partial_kernel(%arg0: i32, %arg1: i32, %arg2: memref<2x64x128xf32, #tpu.memory_space<vmem>>, %arg3: memref<2x64x128xf32, #tpu.memory_space<vmem>>, %arg4: memref<1x3x2x8x128xf32, #tpu.memory_space<vmem>>) attributes {dimension_semantics = [#tpu.dimension_semantics<parallel>, #tpu.dimension_semantics<arbitrary>], iteration_bounds = array<i64: 1, 1>, scalar_prefetch = 0 : i64, scratch_operands = 0 : i64, tpu.core_type = #tpu.core_type<tc>, window_params = [{transform_indices = @transform_0, window_bounds = array<i64: 2, 64, 128>}, {transform_indices = @transform_1, window_bounds = array<i64: 2, 64, 128>}, {transform_indices = @transform_2, window_bounds = array<i64: 1, 3, 2, 8, 128>}]} {
    %c0_i32 = arith.constant 0 : i32
    %0 = arith.cmpi eq, %arg1, %c0_i32 : i32
    %1 = arith.extui %0 : i1 to i32
    %c0_i32_0 = arith.constant 0 : i32
    %2 = arith.cmpi ne, %1, %c0_i32_0 : i32
    scf.if %2 {
      %cst = arith.constant 0.000000e+00 : f32
      %13 = vector.broadcast %cst : f32 to vector<1x3x2x8x128xf32>
      %c0 = arith.constant 0 : index
      %c0_4 = arith.constant 0 : index
      %c0_5 = arith.constant 0 : index
      %c0_6 = arith.constant 0 : index
      %c0_7 = arith.constant 0 : index
      %14 = vector.load %arg4[%c0, %c0_4, %c0_5, %c0_6, %c0_7] : memref<1x3x2x8x128xf32, #tpu.memory_space<vmem>>, vector<1x3x2x8x128xf32>
      tpu.vector_store %arg4[%c0, %c0_4, %c0_5, %c0_6, %c0_7], %13 {strides = array<i32>} : memref<1x3x2x8x128xf32, #tpu.memory_space<vmem>>, vector<1x3x2x8x128xf32>,
    } else {
    }
    %c1_i32 = arith.constant 1 : i32
    %3 = arith.muli %arg0, %c1_i32 : i32
    %4 = arith.addi %3, %arg1 : i32
    %c64_i32 = arith.constant 64 : i32
    %5 = arith.muli %4, %c64_i32 : i32
    %c64_i32_1 = arith.constant 64 : i32
    %6 = arith.addi %5, %c64_i32_1 : i32
    %c2_i32 = arith.constant 2 : i32
    %7 = arith.cmpi sgt, %6, %c2_i32 : i32
    %8 = arith.extui %7 : i1 to i32
    %c0_i32_2 = arith.constant 0 : i32
    %9 = arith.cmpi ne, %8, %c0_i32_2 : i32
    scf.if %9 {
      %cst = arith.constant 0.000000e+00 : f32
      %13 = vector.broadcast %cst : f32 to vector<2x8x128xf32>
      %c0_i32_4 = arith.constant 0 : i32
      %c64_i32_5 = arith.constant 64 : i32
      %14 = arith.muli %c0_i32_4, %c64_i32_5 : i32
      %15 = tpu.assume_multiple %14, 64 : i32
      %c0 = arith.constant 0 : index
      %16 = arith.index_cast %15 : i32 to index
      %c0_6 = arith.constant 0 : index
      %17 = vector.load %arg2[%c0, %16, %c0_6] : memref<2x64x128xf32, #tpu.memory_space<vmem>>, vector<2x64x128xf32>
      %c0_7 = arith.constant 0 : index
      %18 = arith.index_cast %15 : i32 to index
      %c0_8 = arith.constant 0 : index
      %19 = vector.load %arg3[%c0_7, %18, %c0_8] : memref<2x64x128xf32, #tpu.memory_space<vmem>>, vector<2x64x128xf32>
      %20 = arith.addi %5, %15 : i32
      %21 = tpu.iota {dimensions = array<i32: 1>} : vector<1x64x1xi32>
      %22 = vector.broadcast %20 : i32 to vector<1x64x1xi32>
      %23 = arith.addi %22, %21 : vector<1x64x1xi32>
      %c2_i32_9 = arith.constant 2 : i32
      %24 = vector.broadcast %c2_i32_9 : i32 to vector<1x64x1xi32>
      %25 = arith.cmpi slt, %23, %24 : vector<1x64x1xi32>
      %cst_10 = arith.constant -1.000000e+30 : f32
      %26 = vector.shape_cast %25 : vector<1x64x1xi1> to vector<1x64x1xi1>
      %27 = vector.broadcast %26 : vector<1x64x1xi1> to vector<2x64x128xi1>
      %28 = vector.broadcast %cst_10 : f32 to vector<2x64x128xf32>
      %29 = arith.select %27, %17, %28 : vector<2x64x128xi1>, vector<2x64x128xf32>
      %cst_11 = arith.constant 0.000000e+00 : f32
      %30 = vector.shape_cast %25 : vector<1x64x1xi1> to vector<1x64x1xi1>
      %31 = vector.broadcast %30 : vector<1x64x1xi1> to vector<2x64x128xi1>
      %32 = vector.broadcast %cst_11 : f32 to vector<2x64x128xf32>
      %33 = arith.select %31, %19, %32 : vector<2x64x128xi1>, vector<2x64x128xf32>
      %cst_12 = arith.constant 5.000000e-01 : f32
      %34 = vector.broadcast %cst_12 : f32 to vector<2x64x128xf32>
      %35 = arith.mulf %34, %29 : vector<2x64x128xf32>
      %36 = math.tanh %35 : vector<2x64x128xf32>
      %cst_13 = arith.constant 5.000000e-01 : f32
      %37 = vector.broadcast %cst_13 : f32 to vector<2x64x128xf32>
      %38 = arith.mulf %37, %36 : vector<2x64x128xf32>
      %cst_14 = arith.constant 5.000000e-01 : f32
      %39 = vector.broadcast %cst_14 : f32 to vector<2x64x128xf32>
      %40 = arith.addf %38, %39 : vector<2x64x128xf32>
      %41 = vector.shape_cast %40 : vector<2x64x128xf32> to vector<2x8x8x128xf32>
      %42 = vector.shape_cast %33 : vector<2x64x128xf32> to vector<2x8x8x128xf32>
      %43 = arith.mulf %41, %42 : vector<2x8x8x128xf32>
      %cst_15 = arith.constant dense<0.000000e+00> : vector<2x8x128xf32>
      %44 = vector.multi_reduction <add>, %43, %cst_15 [1] : vector<2x8x8x128xf32> to vector<2x8x128xf32>
      %45 = arith.addf %13, %44 : vector<2x8x128xf32>
      %46 = arith.mulf %41, %41 : vector<2x8x8x128xf32>
      %cst_16 = arith.constant dense<0.000000e+00> : vector<2x8x128xf32>
      %47 = vector.multi_reduction <add>, %46, %cst_16 [1] : vector<2x8x8x128xf32> to vector<2x8x128xf32>
      %48 = arith.addf %13, %47 : vector<2x8x128xf32>
      %49 = arith.mulf %42, %42 : vector<2x8x8x128xf32>
      %cst_17 = arith.constant dense<0.000000e+00> : vector<2x8x128xf32>
      %50 = vector.multi_reduction <add>, %49, %cst_17 [1] : vector<2x8x8x128xf32> to vector<2x8x128xf32>
      %51 = arith.addf %13, %50 : vector<2x8x128xf32>
      %c1_i32_18 = arith.constant 1 : i32
      %c0_19 = arith.constant 0 : index
      %c0_20 = arith.constant 0 : index
      %c0_21 = arith.constant 0 : index
      %c0_22 = arith.constant 0 : index
      %c0_23 = arith.constant 0 : index
      %52 = vector.load %arg4[%c0_19, %c0_20, %c0_21, %c0_22, %c0_23] : memref<1x3x2x8x128xf32, #tpu.memory_space<vmem>>, vector<1x1x2x8x128xf32>
      %53 = vector.shape_cast %52 : vector<1x1x2x8x128xf32> to vector<2x8x128xf32>
      %54 = arith.addf %53, %45 : vector<2x8x128xf32>
      %c0_24 = arith.constant 0 : index
      %c0_25 = arith.constant 0 : index
      %c0_26 = arith.constant 0 : index
      %c0_27 = arith.constant 0 : index
      %c0_28 = arith.constant 0 : index
      %55 = vector.load %arg4[%c0_24, %c0_25, %c0_26, %c0_27, %c0_28] : memref<1x3x2x8x128xf32, #tpu.memory_space<vmem>>, vector<1x1x2x8x128xf32>
      %56 = vector.shape_cast %55 : vector<1x1x2x8x128xf32> to vector<2x8x128xf32>
      %57 = vector.shape_cast %54 : vector<2x8x128xf32> to vector<1x1x2x8x128xf32>
      tpu.vector_store %arg4[%c0_24, %c0_25, %c0_26, %c0_27, %c0_28], %57 {strides = array<i32>} : memref<1x3x2x8x128xf32, #tpu.memory_space<vmem>>, vector<1x1x2x8x128xf32>,
      %c0_29 = arith.constant 0 : index
      %c1 = arith.constant 1 : index
      %c0_30 = arith.constant 0 : index
      %c0_31 = arith.constant 0 : index
      %c0_32 = arith.constant 0 : index
      %58 = vector.load %arg4[%c0_29, %c1, %c0_30, %c0_31, %c0_32] : memref<1x3x2x8x128xf32, #tpu.memory_space<vmem>>, vector<1x1x2x8x128xf32>
      %59 = vector.shape_cast %58 : vector<1x1x2x8x128xf32> to vector<2x8x128xf32>
      %60 = arith.addf %59, %48 : vector<2x8x128xf32>
      %c0_33 = arith.constant 0 : index
      %c1_34 = arith.constant 1 : index
      %c0_35 = arith.constant 0 : index
      %c0_36 = arith.constant 0 : index
      %c0_37 = arith.constant 0 : index
      %61 = vector.load %arg4[%c0_33, %c1_34, %c0_35, %c0_36, %c0_37] : memref<1x3x2x8x128xf32, #tpu.memory_space<vmem>>, vector<1x1x2x8x128xf32>
      %62 = vector.shape_cast %61 : vector<1x1x2x8x128xf32> to vector<2x8x128xf32>
      %63 = vector.shape_cast %60 : vector<2x8x128xf32> to vector<1x1x2x8x128xf32>
      tpu.vector_store %arg4[%c0_33, %c1_34, %c0_35, %c0_36, %c0_37], %63 {strides = array<i32>} : memref<1x3x2x8x128xf32, #tpu.memory_space<vmem>>, vector<1x1x2x8x128xf32>,
      %c0_38 = arith.constant 0 : index
      %c2 = arith.constant 2 : index
      %c0_39 = arith.constant 0 : index
      %c0_40 = arith.constant 0 : index
      %c0_41 = arith.constant 0 : index
      %64 = vector.load %arg4[%c0_38, %c2, %c0_39, %c0_40, %c0_41] : memref<1x3x2x8x128xf32, #tpu.memory_space<vmem>>, vector<1x1x2x8x128xf32>
      %65 = vector.shape_cast %64 : vector<1x1x2x8x128xf32> to vector<2x8x128xf32>
      %66 = arith.addf %65, %51 : vector<2x8x128xf32>
      %c0_42 = arith.constant 0 : index
      %c2_43 = arith.constant 2 : index
      %c0_44 = arith.constant 0 : index
      %c0_45 = arith.constant 0 : index
      %c0_46 = arith.constant 0 : index
      %67 = vector.load %arg4[%c0_42, %c2_43, %c0_44, %c0_45, %c0_46] : memref<1x3x2x8x128xf32, #tpu.memory_space<vmem>>, vector<1x1x2x8x128xf32>
      %68 = vector.shape_cast %67 : vector<1x1x2x8x128xf32> to vector<2x8x128xf32>
      %69 = vector.shape_cast %66 : vector<2x8x128xf32> to vector<1x1x2x8x128xf32>
      tpu.vector_store %arg4[%c0_42, %c2_43, %c0_44, %c0_45, %c0_46], %69 {strides = array<i32>} : memref<1x3x2x8x128xf32, #tpu.memory_space<vmem>>, vector<1x1x2x8x128xf32>,
    } else {
    }
    %true = arith.constant true
    %10 = arith.xori %7, %true : i1
    %11 = arith.extui %10 : i1 to i32
    %c0_i32_3 = arith.constant 0 : i32
    %12 = arith.cmpi ne, %11, %c0_i32_3 : i32
    scf.if %12 {
      %cst = arith.constant 0.000000e+00 : f32
      %13 = vector.broadcast %cst : f32 to vector<2x8x128xf32>
      %c0_i32_4 = arith.constant 0 : i32
      %c64_i32_5 = arith.constant 64 : i32
      %14 = arith.muli %c0_i32_4, %c64_i32_5 : i32
      %15 = tpu.assume_multiple %14, 64 : i32
      %c0 = arith.constant 0 : index
      %16 = arith.index_cast %15 : i32 to index
      %c0_6 = arith.constant 0 : index
      %17 = vector.load %arg2[%c0, %16, %c0_6] : memref<2x64x128xf32, #tpu.memory_space<vmem>>, vector<2x64x128xf32>
      %c0_7 = arith.constant 0 : index
      %18 = arith.index_cast %15 : i32 to index
      %c0_8 = arith.constant 0 : index
      %19 = vector.load %arg3[%c0_7, %18, %c0_8] : memref<2x64x128xf32, #tpu.memory_space<vmem>>, vector<2x64x128xf32>
      %cst_9 = arith.constant 5.000000e-01 : f32
      %20 = vector.broadcast %cst_9 : f32 to vector<2x64x128xf32>
      %21 = arith.mulf %20, %17 : vector<2x64x128xf32>
      %22 = math.tanh %21 : vector<2x64x128xf32>
      %cst_10 = arith.constant 5.000000e-01 : f32
      %23 = vector.broadcast %cst_10 : f32 to vector<2x64x128xf32>
      %24 = arith.mulf %23, %22 : vector<2x64x128xf32>
      %cst_11 = arith.constant 5.000000e-01 : f32
      %25 = vector.broadcast %cst_11 : f32 to vector<2x64x128xf32>
      %26 = arith.addf %24, %25 : vector<2x64x128xf32>
      %27 = vector.shape_cast %26 : vector<2x64x128xf32> to vector<2x8x8x128xf32>
      %28 = vector.shape_cast %19 : vector<2x64x128xf32> to vector<2x8x8x128xf32>
      %29 = arith.mulf %27, %28 : vector<2x8x8x128xf32>
      %cst_12 = arith.constant dense<0.000000e+00> : vector<2x8x128xf32>
      %30 = vector.multi_reduction <add>, %29, %cst_12 [1] : vector<2x8x8x128xf32> to vector<2x8x128xf32>
      %31 = arith.addf %13, %30 : vector<2x8x128xf32>
      %32 = arith.mulf %27, %27 : vector<2x8x8x128xf32>
      %cst_13 = arith.constant dense<0.000000e+00> : vector<2x8x128xf32>
      %33 = vector.multi_reduction <add>, %32, %cst_13 [1] : vector<2x8x8x128xf32> to vector<2x8x128xf32>
      %34 = arith.addf %13, %33 : vector<2x8x128xf32>
      %35 = arith.mulf %28, %28 : vector<2x8x8x128xf32>
      %cst_14 = arith.constant dense<0.000000e+00> : vector<2x8x128xf32>
      %36 = vector.multi_reduction <add>, %35, %cst_14 [1] : vector<2x8x8x128xf32> to vector<2x8x128xf32>
      %37 = arith.addf %13, %36 : vector<2x8x128xf32>
      %c1_i32_15 = arith.constant 1 : i32
      %c0_16 = arith.constant 0 : index
      %c0_17 = arith.constant 0 : index
      %c0_18 = arith.constant 0 : index
      %c0_19 = arith.constant 0 : index
      %c0_20 = arith.constant 0 : index
      %38 = vector.load %arg4[%c0_16, %c0_17, %c0_18, %c0_19, %c0_20] : memref<1x3x2x8x128xf32, #tpu.memory_space<vmem>>, vector<1x1x2x8x128xf32>
      %39 = vector.shape_cast %38 : vector<1x1x2x8x128xf32> to vector<2x8x128xf32>
      %40 = arith.addf %39, %31 : vector<2x8x128xf32>
      %c0_21 = arith.constant 0 : index
      %c0_22 = arith.constant 0 : index
      %c0_23 = arith.constant 0 : index
      %c0_24 = arith.constant 0 : index
      %c0_25 = arith.constant 0 : index
      %41 = vector.load %arg4[%c0_21, %c0_22, %c0_23, %c0_24, %c0_25] : memref<1x3x2x8x128xf32, #tpu.memory_space<vmem>>, vector<1x1x2x8x128xf32>
      %42 = vector.shape_cast %41 : vector<1x1x2x8x128xf32> to vector<2x8x128xf32>
      %43 = vector.shape_cast %40 : vector<2x8x128xf32> to vector<1x1x2x8x128xf32>
      tpu.vector_store %arg4[%c0_21, %c0_22, %c0_23, %c0_24, %c0_25], %43 {strides = array<i32>} : memref<1x3x2x8x128xf32, #tpu.memory_space<vmem>>, vector<1x1x2x8x128xf32>,
      %c0_26 = arith.constant 0 : index
      %c1 = arith.constant 1 : index
      %c0_27 = arith.constant 0 : index
      %c0_28 = arith.constant 0 : index
      %c0_29 = arith.constant 0 : index
      %44 = vector.load %arg4[%c0_26, %c1, %c0_27, %c0_28, %c0_29] : memref<1x3x2x8x128xf32, #tpu.memory_space<vmem>>, vector<1x1x2x8x128xf32>
      %45 = vector.shape_cast %44 : vector<1x1x2x8x128xf32> to vector<2x8x128xf32>
      %46 = arith.addf %45, %34 : vector<2x8x128xf32>
      %c0_30 = arith.constant 0 : index
      %c1_31 = arith.constant 1 : index
      %c0_32 = arith.constant 0 : index
      %c0_33 = arith.constant 0 : index
      %c0_34 = arith.constant 0 : index
      %47 = vector.load %arg4[%c0_30, %c1_31, %c0_32, %c0_33, %c0_34] : memref<1x3x2x8x128xf32, #tpu.memory_space<vmem>>, vector<1x1x2x8x128xf32>
      %48 = vector.shape_cast %47 : vector<1x1x2x8x128xf32> to vector<2x8x128xf32>
      %49 = vector.shape_cast %46 : vector<2x8x128xf32> to vector<1x1x2x8x128xf32>
      tpu.vector_store %arg4[%c0_30, %c1_31, %c0_32, %c0_33, %c0_34], %49 {strides = array<i32>} : memref<1x3x2x8x128xf32, #tpu.memory_space<vmem>>, vector<1x1x2x8x128xf32>,
      %c0_35 = arith.constant 0 : index
      %c2 = arith.constant 2 : index
      %c0_36 = arith.constant 0 : index
      %c0_37 = arith.constant 0 : index
      %c0_38 = arith.constant 0 : index
      %50 = vector.load %arg4[%c0_35, %c2, %c0_36, %c0_37, %c0_38] : memref<1x3x2x8x128xf32, #tpu.memory_space<vmem>>, vector<1x1x2x8x128xf32>
      %51 = vector.shape_cast %50 : vector<1x1x2x8x128xf32> to vector<2x8x128xf32>
      %52 = arith.addf %51, %37 : vector<2x8x128xf32>
      %c0_39 = arith.constant 0 : index
      %c2_40 = arith.constant 2 : index
      %c0_41 = arith.constant 0 : index
      %c0_42 = arith.constant 0 : index
      %c0_43 = arith.constant 0 : index
      %53 = vector.load %arg4[%c0_39, %c2_40, %c0_41, %c0_42, %c0_43] : memref<1x3x2x8x128xf32, #tpu.memory_space<vmem>>, vector<1x1x2x8x128xf32>
      %54 = vector.shape_cast %53 : vector<1x1x2x8x128xf32> to vector<2x8x128xf32>
      %55 = vector.shape_cast %52 : vector<2x8x128xf32> to vector<1x1x2x8x128xf32>
      tpu.vector_store %arg4[%c0_39, %c2_40, %c0_41, %c0_42, %c0_43], %55 {strides = array<i32>} : memref<1x3x2x8x128xf32, #tpu.memory_space<vmem>>, vector<1x1x2x8x128xf32>,
    } else {
    }
    return
  }
  func.func @transform_0(%arg0: i32, %arg1: i32) -> (i32, i32, i32) {
    %c1_i32 = arith.constant 1 : i32
    %0 = arith.muli %arg0, %c1_i32 : i32
    %1 = arith.addi %0, %arg1 : i32
    %c0_i32 = arith.constant 0 : i32
    %c0_i32_0 = arith.constant 0 : i32
    %c0_i32_1 = arith.constant 0 : i32
    return %c0_i32, %1, %c0_i32_0 : i32, i32, i32
  }
  func.func @transform_1(%arg0: i32, %arg1: i32) -> (i32, i32, i32) {
    %c1_i32 = arith.constant 1 : i32
    %0 = arith.muli %arg0, %c1_i32 : i32
    %1 = arith.addi %0, %arg1 : i32
    %c0_i32 = arith.constant 0 : i32
    %c0_i32_0 = arith.constant 0 : i32
    %c0_i32_1 = arith.constant 0 : i32
    return %c0_i32, %1, %c0_i32_0 : i32, i32, i32
  }
  func.func @transform_2(%arg0: i32, %arg1: i32) -> (i32, i32, i32, i32, i32) {
    %c0_i32 = arith.constant 0 : i32
    %c0_i32_0 = arith.constant 0 : i32
    %c0_i32_1 = arith.constant 0 : i32
    %c0_i32_2 = arith.constant 0 : i32
    %c0_i32_3 = arith.constant 0 : i32
    return %arg0, %c0_i32, %c0_i32_0, %c0_i32_1, %c0_i32_2 : i32, i32, i32, i32, i32
  }
}

</mosaic_0001>

<llo_original>
// kernel: tpu_custom_call.1
$region0: #{tpu_custom_call.1}
  #allocation0 [shape = 'u32[]', space=smem, size = 0x4, offset = 0x4, fixed_abs, tag = 'smem constant byte address 0x4 - core index']
  #allocation1 [shape = 'u32[144,128]{1,0:T(1,128)}', space=vmem, size = 0x12000, scoped, tag = 'internal scratch']
  #allocation8 [shape = 's32[]', space=sflag, size = 0x4, offset = 0, fixed_abs, tag = 'sflag constant byte address 0x0 - dummy sync flag']
  #allocation10 [shape = 's32[]', space=sflag, size = 0x4, offset = 0, fixed_abs, tag = 'sflag constant byte address 0x0 - dummy sync flag']
  %s0 = inlined_call_operand.hbm [shape: f32[2,2,128], index: 0, kind: input, shape index: {}]
  %s1 = inlined_call_operand.hbm [shape: f32[2,2,128], index: 1, kind: input, shape index: {}]
  %s2 = inlined_call_operand.hbm [shape: f32[1,3,2,8,128], index: 2, kind: output, shape index: {}]
  %s3 = sld [smem:[#allocation0]]
  $region38: #{tpu_custom_call.1} parent=0
    _
  %s5 = ssub.s32 1, %s3
  %s6 = scalar_select 0, %s5, %s3
  $region1: #{tpu_custom_call.1} parent=0
    #allocation2 [shape = 'u8[65536]{0}', space=vmem, size = 0x10000, scoped, tag = 'input window, operand 0, single buffered']
    #allocation3 [shape = 's32[1]{0}', space=sflag, size = 0x4, scoped, tag = 'scoped memory for tpu_custom_call.1']
    #allocation4 [shape = 's32[1]{0}', space=sflag, size = 0x4, scoped, tag = 'scoped memory for tpu_custom_call.1']
    #allocation5 [shape = 'u8[65536]{0}', space=vmem, size = 0x10000, scoped, tag = 'input window, operand 1, single buffered']
    #allocation6 [shape = 's32[1]{0}', space=sflag, size = 0x4, scoped, tag = 'scoped memory for tpu_custom_call.1']
    #allocation7 [shape = 'u8[24576]{0}', space=vmem, size = 0x6000, scoped, tag = 'output window, operand 0, single buffered']
    %7 = vsyncpa [#allocation3], 0
    %8 = vsyncpa [#allocation6], 0
    %9 = vsyncpa [#allocation4], 0
    // Predicated region
    $region2: #{tpu_custom_call.1} parent=1 // pred_check
      _
    $region3: #{tpu_custom_call.1} parent=1 // pred_check_branch
      %11 = sbr.rel (0) target = $region5
    $region4: #{tpu_custom_call.1} parent=1 // pred_region
      #allocation9 [shape = 'u32[6]{0}', space=smem, size = 0x18, scoped, tag = 'DMA stride descriptor']
      %s12 = sadd.s32 0, 0
      %s13 = smul.u32 32, %s12
      %s14 = ssub.s32 1, %s13
      %s15 = smul.u32 64, %s14
      %s17 = ssub.s32 2048, %s15
      %18 = vsyncadd [#allocation3], %s17
      %p19 = scmp.ne.s32.totalorder 0, %s15
      %s20 = smul.addr %s13, 32
      %s21 = scalar_lea.hbm %s0, %s20
      %s22 = smul.u32 2, %s14
      %s23 = smul.u32 %s22, 2
      %s25 = sshll.u32 1, 14
      %s26 = sxor.u32 4294967295, %s25
      %s28 = sld [smem:[#allocation0]]
      %s29 = sadd.s32 2, %s28
      %s31 = sshll.u32 7, 26
      %s32 = sxor.u32 4294967295, %s31
      %s33 = sand.u32 0, %s32
      %s34 = sshll.u32 %s29, 26
      %s35 = sor.u32 %s33, %s34
      %s36 = sshll.u32 [#allocation2], 4
      %s37 = int_to_ptr.vmem [resolvable:$true] %s36
      %s38 = sshll.u32 %s23, 4
      %43 = sst [smem:[#allocation9]] 32
      %s44 = scalar_lea.smem [#allocation9], 1
      %45 = sst [smem:[%s44]] 1024
      %s46 = scalar_lea.smem [#allocation9], 2
      %47 = sst [smem:[%s46]] %s14
      %s48 = scalar_lea.smem [#allocation9], 3
      %49 = sst [smem:[%s48]] 32
      %s50 = scalar_lea.smem [#allocation9], 4
      %51 = sst [smem:[%s50]] 32
      %s52 = scalar_lea.smem [#allocation9], 5
      %53 = sst [smem:[%s52]] 2
      %55 = dma.general (%p19), %s21, %s38, %s37, [#allocation3], [#allocation8], [#allocation9], %s35, 0
    $region5: #{tpu_custom_call.1} parent=1 // pred_fallthru
      _
    // Predicated region
    $region6: #{tpu_custom_call.1} parent=1 // pred_check
      _
    $region7: #{tpu_custom_call.1} parent=1 // pred_check_branch
      %57 = sbr.rel (0) target = $region9
    $region8: #{tpu_custom_call.1} parent=1 // pred_region
      #allocation11 [shape = 'u32[6]{0}', space=smem, size = 0x18, scoped, tag = 'DMA stride descriptor']
      %s58 = sadd.s32 0, 0
      %s59 = smul.u32 32, %s58
      %s60 = ssub.s32 1, %s59
      %s61 = smul.u32 64, %s60
      %s63 = ssub.s32 2048, %s61
      %64 = vsyncadd [#allocation6], %s63
      %p65 = scmp.ne.s32.totalorder 0, %s61
      %s66 = smul.addr %s59, 32
      %s67 = scalar_lea.hbm %s1, %s66
      %s68 = smul.u32 2, %s60
      %s69 = smul.u32 %s68, 2
      %s71 = sshll.u32 1, 14
      %s72 = sxor.u32 4294967295, %s71
      %s74 = sld [smem:[#allocation0]]
      %s75 = sadd.s32 2, %s74
      %s77 = sshll.u32 7, 26
      %s78 = sxor.u32 4294967295, %s77
      %s79 = sand.u32 0, %s78
      %s80 = sshll.u32 %s75, 26
      %s81 = sor.u32 %s79, %s80
      %s82 = sshll.u32 [#allocation5], 4
      %s83 = int_to_ptr.vmem [resolvable:$true] %s82
      %s84 = sshll.u32 %s69, 4
      %89 = sst [smem:[#allocation11]] 32
      %s90 = scalar_lea.smem [#allocation11], 1
      %91 = sst [smem:[%s90]] 1024
      %s92 = scalar_lea.smem [#allocation11], 2
      %93 = sst [smem:[%s92]] %s60
      %s94 = scalar_lea.smem [#allocation11], 3
      %95 = sst [smem:[%s94]] 32
      %s96 = scalar_lea.smem [#allocation11], 4
      %97 = sst [smem:[%s96]] 32
      %s98 = scalar_lea.smem [#allocation11], 5
      %99 = sst [smem:[%s98]] 2
      %101 = dma.general (%p65), %s67, %s84, %s83, [#allocation6], [#allocation10], [#allocation11], %s81, 0
    $region9: #{tpu_custom_call.1} parent=1 // pred_fallthru
      _
    // Predicated region
    $region10: #{tpu_custom_call.1} parent=1 // pred_check
      _
    $region11: #{tpu_custom_call.1} parent=1 // pred_check_branch
      %103 = sbr.rel (0) target = $region13
    $region12: #{tpu_custom_call.1} parent=1 // pred_region
      %104 = dma.done [#allocation3], 2048
    $region13: #{tpu_custom_call.1} parent=1 // pred_fallthru
      _
    // Predicated region
    $region14: #{tpu_custom_call.1} parent=1 // pred_check
      _
    $region15: #{tpu_custom_call.1} parent=1 // pred_check_branch
      %106 = sbr.rel (0) target = $region17
    $region16: #{tpu_custom_call.1} parent=1 // pred_region
      %107 = dma.done [#allocation6], 2048
    $region17: #{tpu_custom_call.1} parent=1 // pred_fallthru
      _
    %s108 = sadd.s32 0, 0
    %s109 = smul.u32 32, %s108
    %s110 = ssub.s32 1, %s109
    %s111 = smul.u32 64, %s110
    %s112 = sadd.s32 0, 0
    %s113 = smul.u32 32, %s112
    %s114 = ssub.s32 1, %s113
    %s115 = smul.u32 64, %s114
    %p116 = scmp.eq.s32.totalorder 0, 0
    // Predicated region
    $region18: #{tpu_custom_call.1} parent=1 // pred_check
      %p117 = pneg %p116
    $region19: #{tpu_custom_call.1} parent=1 // pred_check_branch
      %119 = sbr.rel (%p117) target = $region21
    $region20: #{tpu_custom_call.1} parent=1 // pred_region
      %120 = vst [vmem:[#allocation7] sm:$0xff] 0.0
      %121 = vst [vmem:[#allocation7 + $0x8] sm:$0xff] 0.0
      %122 = vst [vmem:[#allocation7 + $0x10] sm:$0xff] 0.0
      %123 = vst [vmem:[#allocation7 + $0x18] sm:$0xff] 0.0
      %124 = vst [vmem:[#allocation7 + $0x20] sm:$0xff] 0.0
      %125 = vst [vmem:[#allocation7 + $0x28] sm:$0xff] 0.0
    $region21: #{tpu_custom_call.1} parent=1 // pred_fallthru
      _
    %s126 = sadd.s32 0, 0
    %s127 = smul.u32 %s126, 64
    %s128 = sadd.s32 %s127, 64
    %p129 = scmp.gt.s32.totalorder %s128, 2
    // Predicated region
    $region22: #{tpu_custom_call.1} parent=1 // pred_check
      %p130 = pneg %p129
    $region23: #{tpu_custom_call.1} parent=1 // pred_check_branch
      %132 = sbr.rel (%p130) target = $region25
    $region24: #{tpu_custom_call.1} parent=1 // pred_region
      %v133 = vld [vmem:[#allocation2] sm:$0xff]
      %v134 = vld [vmem:[#allocation2 + $0x8] sm:$0xff]
      %v135 = vld [vmem:[#allocation2 + $0x10] sm:$0xff]
      %v136 = vld [vmem:[#allocation2 + $0x18] sm:$0xff]
      %v137 = vld [vmem:[#allocation2 + $0x20] sm:$0xff]
      %v138 = vld [vmem:[#allocation2 + $0x28] sm:$0xff]
      %v139 = vld [vmem:[#allocation2 + $0x30] sm:$0xff]
      %v140 = vld [vmem:[#allocation2 + $0x38] sm:$0xff]
      %v141 = vld [vmem:[#allocation2 + $0x40] sm:$0xff]
      %v142 = vld [vmem:[#allocation2 + $0x48] sm:$0xff]
      %v143 = vld [vmem:[#allocation2 + $0x50] sm:$0xff]
      %v144 = vld [vmem:[#allocation2 + $0x58] sm:$0xff]
      %v145 = vld [vmem:[#allocation2 + $0x60] sm:$0xff]
      %v146 = vld [vmem:[#allocation2 + $0x68] sm:$0xff]
      %v147 = vld [vmem:[#allocation2 + $0x70] sm:$0xff]
      %v148 = vld [vmem:[#allocation2 + $0x78] sm:$0xff]
      %v149 = vld [vmem:[#allocation5] sm:$0xff]
      %v150 = vld [vmem:[#allocation5 + $0x8] sm:$0xff]
      %v151 = vld [vmem:[#allocation5 + $0x10] sm:$0xff]
      %v152 = vld [vmem:[#allocation5 + $0x18] sm:$0xff]
      %v153 = vld [vmem:[#allocation5 + $0x20] sm:$0xff]
      %v154 = vld [vmem:[#allocation5 + $0x28] sm:$0xff]
      %v155 = vld [vmem:[#allocation5 + $0x30] sm:$0xff]
      %v156 = vld [vmem:[#allocation5 + $0x38] sm:$0xff]
      %v157 = vld [vmem:[#allocation5 + $0x40] sm:$0xff]
      %v158 = vld [vmem:[#allocation5 + $0x48] sm:$0xff]
      %v159 = vld [vmem:[#allocation5 + $0x50] sm:$0xff]
      %v160 = vld [vmem:[#allocation5 + $0x58] sm:$0xff]
      %v161 = vld [vmem:[#allocation5 + $0x60] sm:$0xff]
      %v162 = vld [vmem:[#allocation5 + $0x68] sm:$0xff]
      %v163 = vld [vmem:[#allocation5 + $0x70] sm:$0xff]
      %v164 = vld [vmem:[#allocation5 + $0x78] sm:$0xff]
      %s165 = sadd.s32 %s127, 0
      %v166 = vlaneseq
      %v167 = vshrl.u32 %v166, 7
      %v168 = vadd.s32 %v167, 8
      %v169 = vadd.s32 %v167, 16
      %v170 = vadd.s32 %v167, 24
      %v171 = vadd.s32 %v167, 32
      %v172 = vadd.s32 %v167, 40
      %v173 = vadd.s32 %v167, 48
      %v174 = vadd.s32 %v167, 56
      %v175 = vstv %s165
      %v176 = vadd.s32 %v175, %v167
      %v177 = vadd.s32 %v175, %v168
      %v178 = vadd.s32 %v175, %v169
      %v179 = vadd.s32 %v175, %v170
      %v180 = vadd.s32 %v175, %v171
      %v181 = vadd.s32 %v175, %v172
      %v182 = vadd.s32 %v175, %v173
      %v183 = vadd.s32 %v175, %v174
      %vm184 = vcmp.lt.s32.totalorder %v176, 2
      %vm185 = vcmp.lt.s32.totalorder %v177, 2
      %vm186 = vcmp.lt.s32.totalorder %v178, 2
      %vm187 = vcmp.lt.s32.totalorder %v179, 2
      %vm188 = vcmp.lt.s32.totalorder %v180, 2
      %vm189 = vcmp.lt.s32.totalorder %v181, 2
      %vm190 = vcmp.lt.s32.totalorder %v182, 2
      %vm191 = vcmp.lt.s32.totalorder %v183, 2
      %v192 = vsel %vm184, 1, 0
      %v193 = vsel %vm185, 1, 0
      %v194 = vsel %vm186, 1, 0
      %v195 = vsel %vm187, 1, 0
      %v196 = vsel %vm188, 1, 0
      %v197 = vsel %vm189, 1, 0
      %v198 = vsel %vm190, 1, 0
      %v199 = vsel %vm191, 1, 0
      %vm200 = vcmp.eq.s32.totalorder %v192, 1
      %vm201 = vcmp.eq.s32.totalorder %v193, 1
      %vm202 = vcmp.eq.s32.totalorder %v194, 1
      %vm203 = vcmp.eq.s32.totalorder %v195, 1
      %vm204 = vcmp.eq.s32.totalorder %v196, 1
      %vm205 = vcmp.eq.s32.totalorder %v197, 1
      %vm206 = vcmp.eq.s32.totalorder %v198, 1
      %vm207 = vcmp.eq.s32.totalorder %v199, 1
      %v208 = vsel %vm200, %v133, -1e+30
      %v209 = vsel %vm201, %v134, -1e+30
      %v210 = vsel %vm202, %v135, -1e+30
      %v211 = vsel %vm203, %v136, -1e+30
      %v212 = vsel %vm204, %v137, -1e+30
      %v213 = vsel %vm205, %v138, -1e+30
      %v214 = vsel %vm206, %v139, -1e+30
      %v215 = vsel %vm207, %v140, -1e+30
      %v216 = vsel %vm200, %v141, -1e+30
      %v217 = vsel %vm201, %v142, -1e+30
      %v218 = vsel %vm202, %v143, -1e+30
      %v219 = vsel %vm203, %v144, -1e+30
      %v220 = vsel %vm204, %v145, -1e+30
      %v221 = vsel %vm205, %v146, -1e+30
      %v222 = vsel %vm206, %v147, -1e+30
      %v223 = vsel %vm207, %v148, -1e+30
      %v224 = vsel %vm200, %v149, 0.0
      %v225 = vsel %vm201, %v150, 0.0
      %v226 = vsel %vm202, %v151, 0.0
      %v227 = vsel %vm203, %v152, 0.0
      %v228 = vsel %vm204, %v153, 0.0
      %v229 = vsel %vm205, %v154, 0.0
      %v230 = vsel %vm206, %v155, 0.0
      %v231 = vsel %vm207, %v156, 0.0
      %v232 = vsel %vm200, %v157, 0.0
      %v233 = vsel %vm201, %v158, 0.0
      %v234 = vsel %vm202, %v159, 0.0
      %v235 = vsel %vm203, %v160, 0.0
      %v236 = vsel %vm204, %v161, 0.0
      %v237 = vsel %vm205, %v162, 0.0
      %v238 = vsel %vm206, %v163, 0.0
      %v239 = vsel %vm207, %v164, 0.0
      %v240 = vmul.f32 %v208, 0.5
      %v241 = vmul.f32 %v209, 0.5
      %v242 = vmul.f32 %v210, 0.5
      %v243 = vmul.f32 %v211, 0.5
      %v244 = vmul.f32 %v212, 0.5
      %v245 = vmul.f32 %v213, 0.5
      %v246 = vmul.f32 %v214, 0.5
      %v247 = vmul.f32 %v215, 0.5
      %v248 = vmul.f32 %v216, 0.5
      %v249 = vmul.f32 %v217, 0.5
      %v250 = vmul.f32 %v218, 0.5
      %v251 = vmul.f32 %v219, 0.5
      %v252 = vmul.f32 %v220, 0.5
      %v253 = vmul.f32 %v221, 0.5
      %v254 = vmul.f32 %v222, 0.5
      %v255 = vmul.f32 %v223, 0.5
      %v256 = vtanh.pop %v240
      %v257 = vtanh.pop %v241
      %v258 = vtanh.pop %v242
      %v259 = vtanh.pop %v243
      %v260 = vtanh.pop %v244
      %v261 = vtanh.pop %v245
      %v262 = vtanh.pop %v246
      %v263 = vtanh.pop %v247
      %v264 = vtanh.pop %v248
      %v265 = vtanh.pop %v249
      %v266 = vtanh.pop %v250
      %v267 = vtanh.pop %v251
      %v268 = vtanh.pop %v252
      %v269 = vtanh.pop %v253
      %v270 = vtanh.pop %v254
      %v271 = vtanh.pop %v255
      %v272 = vmul.f32 %v256, 0.5
      %v273 = vmul.f32 %v257, 0.5
      %v274 = vmul.f32 %v258, 0.5
      %v275 = vmul.f32 %v259, 0.5
      %v276 = vmul.f32 %v260, 0.5
      %v277 = vmul.f32 %v261, 0.5
      %v278 = vmul.f32 %v262, 0.5
      %v279 = vmul.f32 %v263, 0.5
      %v280 = vmul.f32 %v264, 0.5
      %v281 = vmul.f32 %v265, 0.5
      %v282 = vmul.f32 %v266, 0.5
      %v283 = vmul.f32 %v267, 0.5
      %v284 = vmul.f32 %v268, 0.5
      %v285 = vmul.f32 %v269, 0.5
      %v286 = vmul.f32 %v270, 0.5
      %v287 = vmul.f32 %v271, 0.5
      %v288 = vadd.f32 %v272, 0.5
      %v289 = vadd.f32 %v273, 0.5
      %v290 = vadd.f32 %v274, 0.5
      %v291 = vadd.f32 %v275, 0.5
      %v292 = vadd.f32 %v276, 0.5
      %v293 = vadd.f32 %v277, 0.5
      %v294 = vadd.f32 %v278, 0.5
      %v295 = vadd.f32 %v279, 0.5
      %v296 = vadd.f32 %v280, 0.5
      %v297 = vadd.f32 %v281, 0.5
      %v298 = vadd.f32 %v282, 0.5
      %v299 = vadd.f32 %v283, 0.5
      %v300 = vadd.f32 %v284, 0.5
      %v301 = vadd.f32 %v285, 0.5
      %v302 = vadd.f32 %v286, 0.5
      %v303 = vadd.f32 %v287, 0.5
      %v304 = vmul.f32 %v288, %v224
      %v305 = vmul.f32 %v289, %v225
      %v306 = vmul.f32 %v290, %v226
      %v307 = vmul.f32 %v291, %v227
      %v308 = vmul.f32 %v292, %v228
      %v309 = vmul.f32 %v293, %v229
      %v310 = vmul.f32 %v294, %v230
      %v311 = vmul.f32 %v295, %v231
      %v312 = vmul.f32 %v296, %v232
      %v313 = vmul.f32 %v297, %v233
      %v314 = vmul.f32 %v298, %v234
      %v315 = vmul.f32 %v299, %v235
      %v316 = vmul.f32 %v300, %v236
      %v317 = vmul.f32 %v301, %v237
      %v318 = vmul.f32 %v302, %v238
      %v319 = vmul.f32 %v303, %v239
      %v320 = vadd.f32 %v304, %v305
      %v321 = vadd.f32 %v320, %v306
      %v322 = vadd.f32 %v321, %v307
      %v323 = vadd.f32 %v322, %v308
      %v324 = vadd.f32 %v323, %v309
      %v325 = vadd.f32 %v324, %v310
      %v326 = vadd.f32 %v325, %v311
      %v327 = vadd.f32 %v312, %v313
      %v328 = vadd.f32 %v327, %v314
      %v329 = vadd.f32 %v328, %v315
      %v330 = vadd.f32 %v329, %v316
      %v331 = vadd.f32 %v330, %v317
      %v332 = vadd.f32 %v331, %v318
      %v333 = vadd.f32 %v332, %v319
      %v334 = vadd.f32 %v326, 0.0
      %v335 = vadd.f32 %v333, 0.0
      %v336 = vmul.f32 %v288, %v288
      %v337 = vmul.f32 %v289, %v289
      %v338 = vmul.f32 %v290, %v290
      %v339 = vmul.f32 %v291, %v291
      %v340 = vmul.f32 %v292, %v292
      %v341 = vmul.f32 %v293, %v293
      %v342 = vmul.f32 %v294, %v294
      %v343 = vmul.f32 %v295, %v295
      %v344 = vmul.f32 %v296, %v296
      %v345 = vmul.f32 %v297, %v297
      %v346 = vmul.f32 %v298, %v298
      %v347 = vmul.f32 %v299, %v299
      %v348 = vmul.f32 %v300, %v300
      %v349 = vmul.f32 %v301, %v301
      %v350 = vmul.f32 %v302, %v302
      %v351 = vmul.f32 %v303, %v303
      %v352 = vadd.f32 %v336, %v337
      %v353 = vadd.f32 %v352, %v338
      %v354 = vadd.f32 %v353, %v339
      %v355 = vadd.f32 %v354, %v340
      %v356 = vadd.f32 %v355, %v341
      %v357 = vadd.f32 %v356, %v342
      %v358 = vadd.f32 %v357, %v343
      %v359 = vadd.f32 %v344, %v345
      %v360 = vadd.f32 %v359, %v346
      %v361 = vadd.f32 %v360, %v347
      %v362 = vadd.f32 %v361, %v348
      %v363 = vadd.f32 %v362, %v349
      %v364 = vadd.f32 %v363, %v350
      %v365 = vadd.f32 %v364, %v351
      %v366 = vadd.f32 %v358, 0.0
      %v367 = vadd.f32 %v365, 0.0
      %v368 = vmul.f32 %v224, %v224
      %v369 = vmul.f32 %v225, %v225
      %v370 = vmul.f32 %v226, %v226
      %v371 = vmul.f32 %v227, %v227
      %v372 = vmul.f32 %v228, %v228
      %v373 = vmul.f32 %v229, %v229
      %v374 = vmul.f32 %v230, %v230
      %v375 = vmul.f32 %v231, %v231
      %v376 = vmul.f32 %v232, %v232
      %v377 = vmul.f32 %v233, %v233
      %v378 = vmul.f32 %v234, %v234
      %v379 = vmul.f32 %v235, %v235
      %v380 = vmul.f32 %v236, %v236
      %v381 = vmul.f32 %v237, %v237
      %v382 = vmul.f32 %v238, %v238
      %v383 = vmul.f32 %v239, %v239
      %v384 = vadd.f32 %v368, %v369
      %v385 = vadd.f32 %v384, %v370
      %v386 = vadd.f32 %v385, %v371
      %v387 = vadd.f32 %v386, %v372
      %v388 = vadd.f32 %v387, %v373
      %v389 = vadd.f32 %v388, %v374
      %v390 = vadd.f32 %v389, %v375
      %v391 = vadd.f32 %v376, %v377
      %v392 = vadd.f32 %v391, %v378
      %v393 = vadd.f32 %v392, %v379
      %v394 = vadd.f32 %v393, %v380
      %v395 = vadd.f32 %v394, %v381
      %v396 = vadd.f32 %v395, %v382
      %v397 = vadd.f32 %v396, %v383
      %v398 = vadd.f32 %v390, 0.0
      %v399 = vadd.f32 %v397, 0.0
      %v400 = vld [vmem:[#allocation7] sm:$0xff]
      %v401 = vld [vmem:[#allocation7 + $0x8] sm:$0xff]
      %v402 = vadd.f32 %v400, %v334
      %v403 = vadd.f32 %v401, %v335
      %404 = vst [vmem:[#allocation7] sm:$0xff] %v402
      %405 = vst [vmem:[#allocation7 + $0x8] sm:$0xff] %v403
      %s406 = scalar_lea.vmem [#allocation7], 16
      %v407 = vld [vmem:[%s406] sm:$0xff]
      %v408 = vld [vmem:[%s406 + $0x8] sm:$0xff]
      %v409 = vadd.f32 %v407, %v366
      %v410 = vadd.f32 %v408, %v367
      %411 = vst [vmem:[%s406] sm:$0xff] %v409
      %412 = vst [vmem:[%s406 + $0x8] sm:$0xff] %v410
      %s413 = scalar_lea.vmem [#allocation7], 32
      %v414 = vld [vmem:[%s413] sm:$0xff]
      %v415 = vld [vmem:[%s413 + $0x8] sm:$0xff]
      %v416 = vadd.f32 %v414, %v398
      %v417 = vadd.f32 %v415, %v399
      %418 = vst [vmem:[%s413] sm:$0xff] %v416
      %419 = vst [vmem:[%s413 + $0x8] sm:$0xff] %v417
    $region25: #{tpu_custom_call.1} parent=1 // pred_fallthru
      _
    %p420 = scmp.le.s32.totalorder %s128, 2
    // Predicated region
    $region26: #{tpu_custom_call.1} parent=1 // pred_check
      %p421 = pneg %p420
    $region27: #{tpu_custom_call.1} parent=1 // pred_check_branch
      %423 = sbr.rel (%p421) target = $region29
    $region28: #{tpu_custom_call.1} parent=1 // pred_region
      %v424 = vld [vmem:[#allocation2] sm:$0xff]
      %v425 = vld [vmem:[#allocation2 + $0x8] sm:$0xff]
      %v426 = vld [vmem:[#allocation2 + $0x10] sm:$0xff]
      %v427 = vld [vmem:[#allocation2 + $0x18] sm:$0xff]
      %v428 = vld [vmem:[#allocation2 + $0x20] sm:$0xff]
      %v429 = vld [vmem:[#allocation2 + $0x28] sm:$0xff]
      %v430 = vld [vmem:[#allocation2 + $0x30] sm:$0xff]
      %v431 = vld [vmem:[#allocation2 + $0x38] sm:$0xff]
      %v432 = vld [vmem:[#allocation2 + $0x40] sm:$0xff]
      %v433 = vld [vmem:[#allocation2 + $0x48] sm:$0xff]
      %v434 = vld [vmem:[#allocation2 + $0x50] sm:$0xff]
      %v435 = vld [vmem:[#allocation2 + $0x58] sm:$0xff]
      %v436 = vld [vmem:[#allocation2 + $0x60] sm:$0xff]
      %v437 = vld [vmem:[#allocation2 + $0x68] sm:$0xff]
      %v438 = vld [vmem:[#allocation2 + $0x70] sm:$0xff]
      %v439 = vld [vmem:[#allocation2 + $0x78] sm:$0xff]
      %v440 = vld [vmem:[#allocation5] sm:$0xff]
      %v441 = vld [vmem:[#allocation5 + $0x8] sm:$0xff]
      %v442 = vld [vmem:[#allocation5 + $0x10] sm:$0xff]
      %v443 = vld [vmem:[#allocation5 + $0x18] sm:$0xff]
      %v444 = vld [vmem:[#allocation5 + $0x20] sm:$0xff]
      %v445 = vld [vmem:[#allocation5 + $0x28] sm:$0xff]
      %v446 = vld [vmem:[#allocation5 + $0x30] sm:$0xff]
      %v447 = vld [vmem:[#allocation5 + $0x38] sm:$0xff]
      %v448 = vld [vmem:[#allocation5 + $0x40] sm:$0xff]
      %v449 = vld [vmem:[#allocation5 + $0x48] sm:$0xff]
      %v450 = vld [vmem:[#allocation5 + $0x50] sm:$0xff]
      %v451 = vld [vmem:[#allocation5 + $0x58] sm:$0xff]
      %v452 = vld [vmem:[#allocation5 + $0x60] sm:$0xff]
      %v453 = vld [vmem:[#allocation5 + $0x68] sm:$0xff]
      %v454 = vld [vmem:[#allocation5 + $0x70] sm:$0xff]
      %v455 = vld [vmem:[#allocation5 + $0x78] sm:$0xff]
      %v456 = vmul.f32 %v424, 0.5
      %v457 = vmul.f32 %v425, 0.5
      %v458 = vmul.f32 %v426, 0.5
      %v459 = vmul.f32 %v427, 0.5
      %v460 = vmul.f32 %v428, 0.5
      %v461 = vmul.f32 %v429, 0.5
      %v462 = vmul.f32 %v430, 0.5
      %v463 = vmul.f32 %v431, 0.5
      %v464 = vmul.f32 %v432, 0.5
      %v465 = vmul.f32 %v433, 0.5
      %v466 = vmul.f32 %v434, 0.5
      %v467 = vmul.f32 %v435, 0.5
      %v468 = vmul.f32 %v436, 0.5
      %v469 = vmul.f32 %v437, 0.5
      %v470 = vmul.f32 %v438, 0.5
      %v471 = vmul.f32 %v439, 0.5
      %v472 = vtanh.pop %v456
      %v473 = vtanh.pop %v457
      %v474 = vtanh.pop %v458
      %v475 = vtanh.pop %v459
      %v476 = vtanh.pop %v460
      %v477 = vtanh.pop %v461
      %v478 = vtanh.pop %v462
      %v479 = vtanh.pop %v463
      %v480 = vtanh.pop %v464
      %v481 = vtanh.pop %v465
      %v482 = vtanh.pop %v466
      %v483 = vtanh.pop %v467
      %v484 = vtanh.pop %v468
      %v485 = vtanh.pop %v469
      %v486 = vtanh.pop %v470
      %v487 = vtanh.pop %v471
      %v488 = vmul.f32 %v472, 0.5
      %v489 = vmul.f32 %v473, 0.5
      %v490 = vmul.f32 %v474, 0.5
      %v491 = vmul.f32 %v475, 0.5
      %v492 = vmul.f32 %v476, 0.5
      %v493 = vmul.f32 %v477, 0.5
      %v494 = vmul.f32 %v478, 0.5
      %v495 = vmul.f32 %v479, 0.5
      %v496 = vmul.f32 %v480, 0.5
      %v497 = vmul.f32 %v481, 0.5
      %v498 = vmul.f32 %v482, 0.5
      %v499 = vmul.f32 %v483, 0.5
      %v500 = vmul.f32 %v484, 0.5
      %v501 = vmul.f32 %v485, 0.5
      %v502 = vmul.f32 %v486, 0.5
      %v503 = vmul.f32 %v487, 0.5
      %v504 = vadd.f32 %v488, 0.5
      %v505 = vadd.f32 %v489, 0.5
      %v506 = vadd.f32 %v490, 0.5
      %v507 = vadd.f32 %v491, 0.5
      %v508 = vadd.f32 %v492, 0.5
      %v509 = vadd.f32 %v493, 0.5
      %v510 = vadd.f32 %v494, 0.5
      %v511 = vadd.f32 %v495, 0.5
      %v512 = vadd.f32 %v496, 0.5
      %v513 = vadd.f32 %v497, 0.5
      %v514 = vadd.f32 %v498, 0.5
      %v515 = vadd.f32 %v499, 0.5
      %v516 = vadd.f32 %v500, 0.5
      %v517 = vadd.f32 %v501, 0.5
      %v518 = vadd.f32 %v502, 0.5
      %v519 = vadd.f32 %v503, 0.5
      %v520 = vmul.f32 %v504, %v440
      %v521 = vmul.f32 %v505, %v441
      %v522 = vmul.f32 %v506, %v442
      %v523 = vmul.f32 %v507, %v443
      %v524 = vmul.f32 %v508, %v444
      %v525 = vmul.f32 %v509, %v445
      %v526 = vmul.f32 %v510, %v446
      %v527 = vmul.f32 %v511, %v447
      %v528 = vmul.f32 %v512, %v448
      %v529 = vmul.f32 %v513, %v449
      %v530 = vmul.f32 %v514, %v450
      %v531 = vmul.f32 %v515, %v451
      %v532 = vmul.f32 %v516, %v452
      %v533 = vmul.f32 %v517, %v453
      %v534 = vmul.f32 %v518, %v454
      %v535 = vmul.f32 %v519, %v455
      %v536 = vadd.f32 %v520, %v521
      %v537 = vadd.f32 %v536, %v522
      %v538 = vadd.f32 %v537, %v523
      %v539 = vadd.f32 %v538, %v524
      %v540 = vadd.f32 %v539, %v525
      %v541 = vadd.f32 %v540, %v526
      %v542 = vadd.f32 %v541, %v527
      %v543 = vadd.f32 %v528, %v529
      %v544 = vadd.f32 %v543, %v530
      %v545 = vadd.f32 %v544, %v531
      %v546 = vadd.f32 %v545, %v532
      %v547 = vadd.f32 %v546, %v533
      %v548 = vadd.f32 %v547, %v534
      %v549 = vadd.f32 %v548, %v535
      %v550 = vadd.f32 %v542, 0.0
      %v551 = vadd.f32 %v549, 0.0
      %v552 = vmul.f32 %v504, %v504
      %v553 = vmul.f32 %v505, %v505
      %v554 = vmul.f32 %v506, %v506
      %v555 = vmul.f32 %v507, %v507
      %v556 = vmul.f32 %v508, %v508
      %v557 = vmul.f32 %v509, %v509
      %v558 = vmul.f32 %v510, %v510
      %v559 = vmul.f32 %v511, %v511
      %v560 = vmul.f32 %v512, %v512
      %v561 = vmul.f32 %v513, %v513
      %v562 = vmul.f32 %v514, %v514
      %v563 = vmul.f32 %v515, %v515
      %v564 = vmul.f32 %v516, %v516
      %v565 = vmul.f32 %v517, %v517
      %v566 = vmul.f32 %v518, %v518
      %v567 = vmul.f32 %v519, %v519
      %v568 = vadd.f32 %v552, %v553
      %v569 = vadd.f32 %v568, %v554
      %v570 = vadd.f32 %v569, %v555
      %v571 = vadd.f32 %v570, %v556
      %v572 = vadd.f32 %v571, %v557
      %v573 = vadd.f32 %v572, %v558
      %v574 = vadd.f32 %v573, %v559
      %v575 = vadd.f32 %v560, %v561
      %v576 = vadd.f32 %v575, %v562
      %v577 = vadd.f32 %v576, %v563
      %v578 = vadd.f32 %v577, %v564
      %v579 = vadd.f32 %v578, %v565
      %v580 = vadd.f32 %v579, %v566
      %v581 = vadd.f32 %v580, %v567
      %v582 = vadd.f32 %v574, 0.0
      %v583 = vadd.f32 %v581, 0.0
      %v584 = vmul.f32 %v440, %v440
      %v585 = vmul.f32 %v441, %v441
      %v586 = vmul.f32 %v442, %v442
      %v587 = vmul.f32 %v443, %v443
      %v588 = vmul.f32 %v444, %v444
      %v589 = vmul.f32 %v445, %v445
      %v590 = vmul.f32 %v446, %v446
      %v591 = vmul.f32 %v447, %v447
      %v592 = vmul.f32 %v448, %v448
      %v593 = vmul.f32 %v449, %v449
      %v594 = vmul.f32 %v450, %v450
      %v595 = vmul.f32 %v451, %v451
      %v596 = vmul.f32 %v452, %v452
      %v597 = vmul.f32 %v453, %v453
      %v598 = vmul.f32 %v454, %v454
      %v599 = vmul.f32 %v455, %v455
      %v600 = vadd.f32 %v584, %v585
      %v601 = vadd.f32 %v600, %v586
      %v602 = vadd.f32 %v601, %v587
      %v603 = vadd.f32 %v602, %v588
      %v604 = vadd.f32 %v603, %v589
      %v605 = vadd.f32 %v604, %v590
      %v606 = vadd.f32 %v605, %v591
      %v607 = vadd.f32 %v592, %v593
      %v608 = vadd.f32 %v607, %v594
      %v609 = vadd.f32 %v608, %v595
      %v610 = vadd.f32 %v609, %v596
      %v611 = vadd.f32 %v610, %v597
      %v612 = vadd.f32 %v611, %v598
      %v613 = vadd.f32 %v612, %v599
      %v614 = vadd.f32 %v606, 0.0
      %v615 = vadd.f32 %v613, 0.0
      %v616 = vld [vmem:[#allocation7] sm:$0xff]
      %v617 = vld [vmem:[#allocation7 + $0x8] sm:$0xff]
      %v618 = vadd.f32 %v616, %v550
      %v619 = vadd.f32 %v617, %v551
      %620 = vst [vmem:[#allocation7] sm:$0xff] %v618
      %621 = vst [vmem:[#allocation7 + $0x8] sm:$0xff] %v619
      %s622 = scalar_lea.vmem [#allocation7], 16
      %v623 = vld [vmem:[%s622] sm:$0xff]
      %v624 = vld [vmem:[%s622 + $0x8] sm:$0xff]
      %v625 = vadd.f32 %v623, %v582
      %v626 = vadd.f32 %v624, %v583
      %627 = vst [vmem:[%s622] sm:$0xff] %v625
      %628 = vst [vmem:[%s622 + $0x8] sm:$0xff] %v626
      %s629 = scalar_lea.vmem [#allocation7], 32
      %v630 = vld [vmem:[%s629] sm:$0xff]
      %v631 = vld [vmem:[%s629 + $0x8] sm:$0xff]
      %v632 = vadd.f32 %v630, %v614
      %v633 = vadd.f32 %v631, %v615
      %634 = vst [vmem:[%s629] sm:$0xff] %v632
      %635 = vst [vmem:[%s629 + $0x8] sm:$0xff] %v633
    $region29: #{tpu_custom_call.1} parent=1 // pred_fallthru
      _
    // Predicated region
    $region30: #{tpu_custom_call.1} parent=1 // pred_check
      _
    $region31: #{tpu_custom_call.1} parent=1 // pred_check_branch
      %637 = sbr.rel (0) target = $region33
    $region32: #{tpu_custom_call.1} parent=1 // pred_region
      %s639 = ssub.s32 768, 768
      %640 = vsyncadd [#allocation4], %s639
      %s641 = sshll.u32 [#allocation7], 4
      %s642 = int_to_ptr.vmem [resolvable:$true] %s641
      %647 = dma.vmem_to_hbm [thread:$0]  %s642, 768, %s2, [#allocation4], 128, 128, 8
    $region33: #{tpu_custom_call.1} parent=1 // pred_fallthru
      _
    // Predicated region
    $region34: #{tpu_custom_call.1} parent=1 // pred_check
      _
    $region35: #{tpu_custom_call.1} parent=1 // pred_check_branch
      %649 = sbr.rel (0) target = $region37
    $region36: #{tpu_custom_call.1} parent=1 // pred_region
      %650 = dma.done [#allocation4], 768
    $region37: #{tpu_custom_call.1} parent=1 // pred_fallthru
      _
    %651 = vsyncpa [#allocation3], 1
    %652 = vsyncpa [#allocation6], 1
    %653 = vsyncpa [#allocation4], 1

</llo_original>
